<compile_context>
chip_gen: v5e
topology: v5e:2x2
jax: 0.10.0
libtpu: 0.0.40
codegen_flags: <defaults>
</compile_context>

<pallas_src>
import jax
import jax.numpy as jnp
from jax.experimental import pallas as pl
from jax.experimental.pallas import tpu as pltpu


def _qfunc_kernel(obs_ref, act_ref, w1o_ref, w1a_ref, b1_ref,
                  w2_ref, b2_ref, w3r_ref, b3_ref, o_ref):
    bf16 = jnp.bfloat16

    # Layer 1: split-input matmul replaces the concat([obs, act]) @ w1.
    h = jnp.dot(obs_ref[...].astype(bf16), w1o_ref[...].astype(bf16),
                preferred_element_type=jnp.float32)
    h += jnp.dot(act_ref[...].astype(bf16), w1a_ref[...].astype(bf16),
                 preferred_element_type=jnp.float32)
    h = jnp.maximum(h + b1_ref[...], 0.0)                  # ReLU in f32

    # Layer 2.
    h = jnp.dot(h.astype(bf16), w2_ref[...].astype(bf16),
                preferred_element_type=jnp.float32)
    h = jnp.maximum(h + b2_ref[...], 0.0)                  # ReLU in f32

    # Layer 3 (out_features = 1): VPU multiply + lane reduce instead of an
    # N=1 MXU matmul. w3r_ref is the (1, h2) row form of w3.
    q = jnp.sum(h * w3r_ref[...], axis=-1, keepdims=True) + b3_ref[...]
    o_ref[...] = q.astype(o_ref.dtype)


def _pick_batch_tile(B):
    """Tile multiple of 8 (f32 sublanes), <= 2048, dividing B, grid >= 2 if possible."""
    if B % 8 != 0:
        return B  # single full-batch block (block == full array dim is legal)
    candidates = [t for t in (2048, 1024, 512, 256, 128, 64, 32, 16, 8)
                  if t <= B and B % t == 0]
    for t in candidates:
        if B // t >= 2:          # >= 2 grid steps: pipelining + v7x megacore
            return t
    return candidates[0] if candidates else B


def mlp_qfunction_forward(obs, act, params, *, batch_tile=None):
    """Pallas-backed forward of MLPQFunction. Returns shape (batch,)."""
    w1, b1, w2, b2, w3, b3 = params
    B, obs_dim = obs.shape
    _, act_dim = act.shape
    h1 = w1.shape[1]
    h2 = w2.shape[1]

    tb = batch_tile or _pick_batch_tile(B)
    assert B % tb == 0 and (tb == B or tb % 8 == 0), (B, tb)

    # Static weight prep (tiny tensors; hoist to the caller in production).
    w1_obs = w1[:obs_dim]          # (obs_dim, h1)
    w1_act = w1[obs_dim:]          # (act_dim, h1)
    w3_row = w3.reshape(1, h2)     # (1, h2) row form for the VPU reduce

    grid = (B // tb,)
    flops = 2 * B * (obs_dim * h1 + act_dim * h1 + h1 * h2 + h2)
    bytes_accessed = (B * (obs_dim + act_dim) * 4 + B * 4
                      + (obs_dim + act_dim) * h1 * 4 + h1 * h2 * 4 + h2 * 4
                      + (h1 + h2 + 1) * 4)

    out = pl.pallas_call(
        _qfunc_kernel,
        out_shape=jax.ShapeDtypeStruct((B, 1), jnp.float32),
        grid_spec=pltpu.PrefetchScalarGridSpec(
            num_scalar_prefetch=0,
            grid=grid,
            in_specs=[
                pl.BlockSpec((tb, obs_dim), lambda i: (i, 0)),   # obs: streamed
                pl.BlockSpec((tb, act_dim), lambda i: (i, 0)),   # act: streamed
                pl.BlockSpec((obs_dim, h1), lambda i: (0, 0)),   # w1[:obs_dim], resident
                pl.BlockSpec((act_dim, h1), lambda i: (0, 0)),   # w1[obs_dim:], resident
                pl.BlockSpec((1, h1), lambda i: (0, 0)),         # b1
                pl.BlockSpec((h1, h2), lambda i: (0, 0)),        # w2
                pl.BlockSpec((1, h2), lambda i: (0, 0)),         # b2
                pl.BlockSpec((1, h2), lambda i: (0, 0)),         # w3 as row
                pl.BlockSpec((1, 1), lambda i: (0, 0)),          # b3
            ],
            out_specs=pl.BlockSpec((tb, 1), lambda i: (i, 0)),
        ),
        compiler_params=pltpu.CompilerParams(
            dimension_semantics=("parallel",),
        ),
        cost_estimate=pl.CostEstimate(
            flops=flops, transcendentals=0, bytes_accessed=bytes_accessed),
    )(obs, act, w1_obs, w1_act, b1, w2, b2, w3_row, b3)
    return jnp.squeeze(out, -1)                                  # torch.squeeze(q, -1)


def init_params(key, obs_dim, act_dim, hidden_sizes):
    """Deterministic init matching the layer shapes of MLPQFunction.__init__."""
    sizes = [obs_dim + act_dim] + list(hidden_sizes) + [1]
    params = []
    for i in range(len(sizes) - 1):
        key, kw = jax.random.split(key)
        fan_in = sizes[i]
        bound = 1.0 / jnp.sqrt(fan_in)
        w = jax.random.uniform(kw, (sizes[i], sizes[i + 1]), jnp.float32,
                               minval=-bound, maxval=bound)
        b = jnp.zeros((1, sizes[i + 1]), jnp.float32)
        params.extend([w, b])
    return tuple(params)


def _reference_f32(obs, act, params):
    w1, b1, w2, b2, w3, b3 = params
    x = jnp.concatenate([obs, act], axis=-1)
    h = jax.nn.relu(x @ w1 + b1)
    h = jax.nn.relu(h @ w2 + b2)
    return jnp.squeeze(h @ w3 + b3, -1)


def _reference_bf16(obs, act, params):
    """Pure-JAX mirror of the kernel's bf16-operand / f32-accumulate math."""
    w1, b1, w2, b2, w3, b3 = params
    obs_dim = obs.shape[-1]
    bf = jnp.bfloat16
    h = (jnp.dot(obs.astype(bf), w1[:obs_dim].astype(bf),
                 preferred_element_type=jnp.float32)
         + jnp.dot(act.astype(bf), w1[obs_dim:].astype(bf),
                   preferred_element_type=jnp.float32))
    h = jnp.maximum(h + b1, 0.0)
    h = jnp.dot(h.astype(bf), w2.astype(bf), preferred_element_type=jnp.float32)
    h = jnp.maximum(h + b2, 0.0)
    q = jnp.sum(h * w3.reshape(1, -1), axis=-1, keepdims=True) + b3
    return jnp.squeeze(q, -1)


if __name__ == "__main__":
    obs_dim, act_dim = 16, 8
    hidden_sizes = (32, 32)
    batch = 256   # small, but enough for >= 2 grid steps (tile picker -> tb=128)

    key = jax.random.PRNGKey(0)
    k_obs, k_act, k_par = jax.random.split(key, 3)
    obs = jax.random.normal(k_obs, (batch, obs_dim), jnp.float32)
    act = jax.random.normal(k_act, (batch, act_dim), jnp.float32)
    params = init_params(k_par, obs_dim, act_dim, hidden_sizes)

    q = mlp_qfunction_forward(obs, act, params)
    q = jax.block_until_ready(q)
    assert q.shape == (batch,), q.shape

    # Tight check against a reference doing the same bf16-operand math.
    q_bf = _reference_bf16(obs, act, params)
    assert jnp.allclose(q, q_bf, atol=1e-4, rtol=1e-4)

    # Loose check against the full-f32 PyTorch-equivalent semantics
    # (bf16 matmul operands introduce ~1e-3-level relative deviation).
    q_f32 = _reference_f32(obs, act, params)
    assert jnp.allclose(q, q_f32, atol=3e-2, rtol=3e-2)

    print("KERNEL_OK")
</pallas_src>

<mosaic_0001>
module attributes {stable_mosaic.version = 11 : i64} {
  func.func @_qfunc_kernel(%arg0: i32, %arg1: memref<128x16xf32, #tpu.memory_space<vmem>>, %arg2: memref<128x8xf32, #tpu.memory_space<vmem>>, %arg3: memref<16x32xf32, #tpu.memory_space<vmem>>, %arg4: memref<8x32xf32, #tpu.memory_space<vmem>>, %arg5: memref<1x32xf32, #tpu.memory_space<vmem>>, %arg6: memref<32x32xf32, #tpu.memory_space<vmem>>, %arg7: memref<1x32xf32, #tpu.memory_space<vmem>>, %arg8: memref<1x32xf32, #tpu.memory_space<vmem>>, %arg9: memref<1x1xf32, #tpu.memory_space<vmem>>, %arg10: memref<128x1xf32, #tpu.memory_space<vmem>>) attributes {dimension_semantics = [#tpu.dimension_semantics<parallel>], iteration_bounds = array<i64: 2>, scalar_prefetch = 0 : i64, scratch_operands = 0 : i64, tpu.core_type = #tpu.core_type<tc>, window_params = [{transform_indices = @transform_0, window_bounds = array<i64: 128, 16>}, {transform_indices = @transform_1, window_bounds = array<i64: 128, 8>}, {pipeline_mode = #tpu.pipeline_mode<synchronous>, transform_indices = @transform_2, window_bounds = array<i64: 16, 32>}, {pipeline_mode = #tpu.pipeline_mode<synchronous>, transform_indices = @transform_3, window_bounds = array<i64: 8, 32>}, {pipeline_mode = #tpu.pipeline_mode<synchronous>, transform_indices = @transform_4, window_bounds = array<i64: 1, 32>}, {pipeline_mode = #tpu.pipeline_mode<synchronous>, transform_indices = @transform_5, window_bounds = array<i64: 32, 32>}, {pipeline_mode = #tpu.pipeline_mode<synchronous>, transform_indices = @transform_6, window_bounds = array<i64: 1, 32>}, {pipeline_mode = #tpu.pipeline_mode<synchronous>, transform_indices = @transform_7, window_bounds = array<i64: 1, 32>}, {pipeline_mode = #tpu.pipeline_mode<synchronous>, transform_indices = @transform_8, window_bounds = array<i64: 1, 1>}, {transform_indices = @transform_9, window_bounds = array<i64: 128, 1>}]} {
    %c0 = arith.constant 0 : index
    %c0_0 = arith.constant 0 : index
    %0 = vector.load %arg1[%c0, %c0_0] : memref<128x16xf32, #tpu.memory_space<vmem>>, vector<128x16xf32>
    %1 = arith.truncf %0 : vector<128x16xf32> to vector<128x16xbf16>
    %c0_1 = arith.constant 0 : index
    %c0_2 = arith.constant 0 : index
    %2 = vector.load %arg3[%c0_1, %c0_2] : memref<16x32xf32, #tpu.memory_space<vmem>>, vector<16x32xf32>
    %3 = arith.truncf %2 : vector<16x32xf32> to vector<16x32xbf16>
    %cst = arith.constant dense<0.000000e+00> : vector<128x32xf32>
    %4 = tpu.matmul %1, %3, %cst {dimension_numbers = #tpu.dot_dimension_numbers<[1], [0], [0], [1], [0, 0, 1, 1], [], []>} : vector<128x16xbf16>, vector<16x32xbf16>, vector<128x32xf32> -> vector<128x32xf32>
    %c0_3 = arith.constant 0 : index
    %c0_4 = arith.constant 0 : index
    %5 = vector.load %arg2[%c0_3, %c0_4] : memref<128x8xf32, #tpu.memory_space<vmem>>, vector<128x8xf32>
    %6 = arith.truncf %5 : vector<128x8xf32> to vector<128x8xbf16>
    %c0_5 = arith.constant 0 : index
    %c0_6 = arith.constant 0 : index
    %7 = vector.load %arg4[%c0_5, %c0_6] : memref<8x32xf32, #tpu.memory_space<vmem>>, vector<8x32xf32>
    %8 = arith.truncf %7 : vector<8x32xf32> to vector<8x32xbf16>
    %cst_7 = arith.constant dense<0.000000e+00> : vector<128x32xf32>
    %9 = tpu.matmul %6, %8, %cst_7 {dimension_numbers = #tpu.dot_dimension_numbers<[1], [0], [0], [1], [0, 0, 1, 1], [], []>} : vector<128x8xbf16>, vector<8x32xbf16>, vector<128x32xf32> -> vector<128x32xf32>
    %10 = arith.addf %4, %9 : vector<128x32xf32>
    %c0_8 = arith.constant 0 : index
    %c0_9 = arith.constant 0 : index
    %11 = vector.load %arg5[%c0_8, %c0_9] : memref<1x32xf32, #tpu.memory_space<vmem>>, vector<1x32xf32>
    %12 = vector.broadcast %11 : vector<1x32xf32> to vector<128x32xf32>
    %13 = arith.addf %10, %12 : vector<128x32xf32>
    %cst_10 = arith.constant 0.000000e+00 : f32
    %14 = vector.broadcast %cst_10 : f32 to vector<128x32xf32>
    %15 = arith.maximumf %13, %14 : vector<128x32xf32>
    %16 = arith.truncf %15 : vector<128x32xf32> to vector<128x32xbf16>
    %c0_11 = arith.constant 0 : index
    %c0_12 = arith.constant 0 : index
    %17 = vector.load %arg6[%c0_11, %c0_12] : memref<32x32xf32, #tpu.memory_space<vmem>>, vector<32x32xf32>
    %18 = arith.truncf %17 : vector<32x32xf32> to vector<32x32xbf16>
    %cst_13 = arith.constant dense<0.000000e+00> : vector<128x32xf32>
    %19 = tpu.matmul %16, %18, %cst_13 {dimension_numbers = #tpu.dot_dimension_numbers<[1], [0], [0], [1], [0, 0, 1, 1], [], []>} : vector<128x32xbf16>, vector<32x32xbf16>, vector<128x32xf32> -> vector<128x32xf32>
    %c0_14 = arith.constant 0 : index
    %c0_15 = arith.constant 0 : index
    %20 = vector.load %arg7[%c0_14, %c0_15] : memref<1x32xf32, #tpu.memory_space<vmem>>, vector<1x32xf32>
    %21 = vector.broadcast %20 : vector<1x32xf32> to vector<128x32xf32>
    %22 = arith.addf %19, %21 : vector<128x32xf32>
    %cst_16 = arith.constant 0.000000e+00 : f32
    %23 = vector.broadcast %cst_16 : f32 to vector<128x32xf32>
    %24 = arith.maximumf %22, %23 : vector<128x32xf32>
    %c0_17 = arith.constant 0 : index
    %c0_18 = arith.constant 0 : index
    %25 = vector.load %arg8[%c0_17, %c0_18] : memref<1x32xf32, #tpu.memory_space<vmem>>, vector<1x32xf32>
    %26 = vector.broadcast %25 : vector<1x32xf32> to vector<128x32xf32>
    %27 = arith.mulf %24, %26 : vector<128x32xf32>
    %cst_19 = arith.constant dense<0.000000e+00> : vector<128xf32>
    %28 = vector.multi_reduction <add>, %27, %cst_19 [1] : vector<128x32xf32> to vector<128xf32>
    %29 = vector.shape_cast %28 : vector<128xf32> to vector<128x1xf32>
    %c0_20 = arith.constant 0 : index
    %c0_21 = arith.constant 0 : index
    %30 = vector.load %arg9[%c0_20, %c0_21] : memref<1x1xf32, #tpu.memory_space<vmem>>, vector<1x1xf32>
    %31 = vector.broadcast %30 : vector<1x1xf32> to vector<128x1xf32>
    %32 = arith.addf %29, %31 : vector<128x1xf32>
    %c0_22 = arith.constant 0 : index
    %c0_23 = arith.constant 0 : index
    %33 = vector.load %arg10[%c0_22, %c0_23] : memref<128x1xf32, #tpu.memory_space<vmem>>, vector<128x1xf32>
    tpu.vector_store %arg10[%c0_22, %c0_23], %32 {strides = array<i32>} : memref<128x1xf32, #tpu.memory_space<vmem>>, vector<128x1xf32>,
    return
  }
  func.func @transform_0(%arg0: i32) -> (i32, i32) {
    %c0_i32 = arith.constant 0 : i32
    %c0_i32_0 = arith.constant 0 : i32
    return %arg0, %c0_i32 : i32, i32
  }
  func.func @transform_1(%arg0: i32) -> (i32, i32) {
    %c0_i32 = arith.constant 0 : i32
    %c0_i32_0 = arith.constant 0 : i32
    return %arg0, %c0_i32 : i32, i32
  }
  func.func @transform_2(%arg0: i32) -> (i32, i32) {
    %c0_i32 = arith.constant 0 : i32
    %c0_i32_0 = arith.constant 0 : i32
    %c0_i32_1 = arith.constant 0 : i32
    return %c0_i32, %c0_i32_0 : i32, i32
  }
  func.func @transform_3(%arg0: i32) -> (i32, i32) {
    %c0_i32 = arith.constant 0 : i32
    %c0_i32_0 = arith.constant 0 : i32
    %c0_i32_1 = arith.constant 0 : i32
    return %c0_i32, %c0_i32_0 : i32, i32
  }
  func.func @transform_4(%arg0: i32) -> (i32, i32) {
    %c0_i32 = arith.constant 0 : i32
    %c0_i32_0 = arith.constant 0 : i32
    %c0_i32_1 = arith.constant 0 : i32
    return %c0_i32, %c0_i32_0 : i32, i32
  }
  func.func @transform_5(%arg0: i32) -> (i32, i32) {
    %c0_i32 = arith.constant 0 : i32
    %c0_i32_0 = arith.constant 0 : i32
    %c0_i32_1 = arith.constant 0 : i32
    return %c0_i32, %c0_i32_0 : i32, i32
  }
  func.func @transform_6(%arg0: i32) -> (i32, i32) {
    %c0_i32 = arith.constant 0 : i32
    %c0_i32_0 = arith.constant 0 : i32
    %c0_i32_1 = arith.constant 0 : i32
    return %c0_i32, %c0_i32_0 : i32, i32
  }
  func.func @transform_7(%arg0: i32) -> (i32, i32) {
    %c0_i32 = arith.constant 0 : i32
    %c0_i32_0 = arith.constant 0 : i32
    %c0_i32_1 = arith.constant 0 : i32
    return %c0_i32, %c0_i32_0 : i32, i32
  }
  func.func @transform_8(%arg0: i32) -> (i32, i32) {
    %c0_i32 = arith.constant 0 : i32
    %c0_i32_0 = arith.constant 0 : i32
    %c0_i32_1 = arith.constant 0 : i32
    return %c0_i32, %c0_i32_0 : i32, i32
  }
  func.func @transform_9(%arg0: i32) -> (i32, i32) {
    %c0_i32 = arith.constant 0 : i32
    %c0_i32_0 = arith.constant 0 : i32
    return %arg0, %c0_i32 : i32, i32
  }
}

</mosaic_0001>

<llo_original>
// kernel: tpu_custom_call.1
$region0: #{tpu_custom_call.1}
  #allocation0 [shape = 'u32[]', space=smem, size = 0x4, offset = 0x4, fixed_abs, tag = 'smem constant byte address 0x4 - core index']
  #allocation1 [shape = 'u32[72,128]{1,0:T(1,128)}', space=vmem, size = 0x9000, scoped, tag = 'internal scratch']
  #allocation2 [shape = 'f32[1,1]{1,0:T(1,128)S(1)}', space=vmem, size = 0x200, scoped, tag = 'scoped memory for tpu_custom_call.1']
  %s0 = inlined_call_operand.vmem [shape: f32[256,16], index: 0, kind: input, shape index: {}]
  %s1 = inlined_call_operand.vmem [shape: f32[256,8], index: 1, kind: input, shape index: {}]
  %s2 = inlined_call_operand.vmem [shape: f32[16,32], index: 2, kind: input, shape index: {}]
  %s3 = inlined_call_operand.vmem [shape: f32[8,32], index: 3, kind: input, shape index: {}]
  %s4 = inlined_call_operand.vmem [shape: f32[1,32], index: 4, kind: input, shape index: {}]
  %s5 = inlined_call_operand.vmem [shape: f32[32,32], index: 5, kind: input, shape index: {}]
  %s6 = inlined_call_operand.vmem [shape: f32[1,32], index: 6, kind: input, shape index: {}]
  %s7 = inlined_call_operand.vmem [shape: f32[1,32], index: 7, kind: input, shape index: {}]
  %s8 = inlined_call_operand.<no memory space> [shape: f32[1,1], index: 8, kind: input, shape index: {}]
  %s9 = inlined_call_operand.vmem [shape: f32[256,1], index: 9, kind: output, shape index: {}]
  %s10 = sld [smem:[#allocation0]]
  $region69: #{tpu_custom_call.1} parent=0
    _
  %s12 = ssub.s32 1, %s10
  %s13 = scalar_select 0, %s12, %s10
  %v14 = vstv %s8
  %15 = vst [vmem:[#allocation2] sm:$0x1] %v14
  loop: start=0, step=1, limit=4
  $region2: #{tpu_custom_call.1} parent=0 // loop_pre_header
    _
  $region3: #{tpu_custom_call.1} parent=0 // loop_header
    %s17 = sphi 0, %s21
    %p18 = scmp.ge.s32.totalorder %s17, 4
    %s27 = sphi 0, %s29
    %s30 = sphi 0, %s27
    %s31 = sphi 0, %s30
    %s47 = sphi 0, %s31
    %s53 = sphi 0, %s55
    %s56 = sphi 0, %s53
    %s57 = sphi 0, %s56
    %s73 = sphi 0, %s57
    %s77 = sphi 0, %s77
    %s79 = sphi 0, %s77
    %s80 = sphi 0, %s79
    %s94 = sphi 0, %s80
    %s98 = sphi 0, %s98
    %s100 = sphi 0, %s98
    %s101 = sphi 0, %s100
    %s115 = sphi 0, %s101
    %s119 = sphi 0, %s119
    %s121 = sphi 0, %s119
    %s122 = sphi 0, %s121
    %s136 = sphi 0, %s122
    %s140 = sphi 0, %s140
    %s142 = sphi 0, %s140
    %s143 = sphi 0, %s142
    %s157 = sphi 0, %s143
    %s161 = sphi 0, %s161
    %s163 = sphi 0, %s161
    %s164 = sphi 0, %s163
    %s178 = sphi 0, %s164
    %s182 = sphi 0, %s182
    %s184 = sphi 0, %s182
    %s185 = sphi 0, %s184
    %s199 = sphi 0, %s185
    %s203 = sphi 0, %s203
    %s205 = sphi 0, %s203
    %s206 = sphi 0, %s205
    %s220 = sphi 0, %s206
    %s226 = sphi 0, %s228
    %s229 = sphi 0, %s226
    %s230 = sphi 0, %s229
    %s246 = sphi 0, %s230
  $region4: #{tpu_custom_call.1} parent=0 // loop_header_branch
    %20 = sbr.rel (%p18) target = $region8
  $region5: #{tpu_custom_call.1} parent=0 // loop_body
    %s22 = ssub.s32 %s17, 1
    %s23 = ssub.s32 %s17, 2
    %s24 = sadd.s32 %s17, 1
    %s25 = ssub.s32 %s17, %s24
    %p26 = scmp.eq.s32.totalorder %s25, 0
    %s28 = sadd.s32 %s27, 1
    %s29 = scalar_select %p26, %s27, %s28
    %p32 = pneg %p26
    %p33 = scmp.eq.s32.totalorder %s17, 1
    %p34 = por %p32, %p33
    %p35 = scmp.ne.s32.totalorder %s27, %s30
    %p36 = scmp.eq.s32.totalorder %s17, 0
    %p37 = por %p35, %p36
    %p38 = scmp.ne.s32.totalorder %s27, %s30
    %p39 = scmp.eq.s32.totalorder %s22, 1
    %p40 = por %p38, %p39
    %p41 = scmp.ne.s32.totalorder %s30, %s31
    %p42 = scmp.eq.s32.totalorder %s22, 0
    %p43 = por %p41, %p42
    %p44 = scmp.ne.s32.totalorder %s30, %s31
    %p45 = scmp.eq.s32.totalorder %s23, 1
    %p46 = por %p44, %p45
    %p48 = scmp.ne.s32.totalorder %s31, %s47
    %p49 = scmp.eq.s32.totalorder %s23, 0
    %p50 = por %p48, %p49
    %s51 = ssub.s32 %s17, %s24
    %p52 = scmp.eq.s32.totalorder %s51, 0
    %s54 = sadd.s32 %s53, 1
    %s55 = scalar_select %p52, %s53, %s54
    %p58 = pneg %p52
    %p59 = scmp.eq.s32.totalorder %s17, 1
    %p60 = por %p58, %p59
    %p61 = scmp.ne.s32.totalorder %s53, %s56
    %p62 = scmp.eq.s32.totalorder %s17, 0
    %p63 = por %p61, %p62
    %p64 = scmp.ne.s32.totalorder %s53, %s56
    %p65 = scmp.eq.s32.totalorder %s22, 1
    %p66 = por %p64, %p65
    %p67 = scmp.ne.s32.totalorder %s56, %s57
    %p68 = scmp.eq.s32.totalorder %s22, 0
    %p69 = por %p67, %p68
    %p70 = scmp.ne.s32.totalorder %s56, %s57
    %p71 = scmp.eq.s32.totalorder %s23, 1
    %p72 = por %p70, %p71
    %p74 = scmp.ne.s32.totalorder %s57, %s73
    %p75 = scmp.eq.s32.totalorder %s23, 0
    %p76 = por %p74, %p75
    %s78 = sadd.s32 %s77, 1
    %p81 = scmp.eq.s32.totalorder %s17, 1
    %p82 = scmp.ne.s32.totalorder %s77, %s79
    %p83 = scmp.eq.s32.totalorder %s17, 0
    %p84 = por %p82, %p83
    %p85 = scmp.ne.s32.totalorder %s77, %s79
    %p86 = scmp.eq.s32.totalorder %s22, 1
    %p87 = por %p85, %p86
    %p88 = scmp.ne.s32.totalorder %s79, %s80
    %p89 = scmp.eq.s32.totalorder %s22, 0
    %p90 = por %p88, %p89
    %p91 = scmp.ne.s32.totalorder %s79, %s80
    %p92 = scmp.eq.s32.totalorder %s23, 1
    %p93 = por %p91, %p92
    %p95 = scmp.ne.s32.totalorder %s80, %s94
    %p96 = scmp.eq.s32.totalorder %s23, 0
    %p97 = por %p95, %p96
    %s99 = sadd.s32 %s98, 1
    %p102 = scmp.eq.s32.totalorder %s17, 1
    %p103 = scmp.ne.s32.totalorder %s98, %s100
    %p104 = scmp.eq.s32.totalorder %s17, 0
    %p105 = por %p103, %p104
    %p106 = scmp.ne.s32.totalorder %s98, %s100
    %p107 = scmp.eq.s32.totalorder %s22, 1
    %p108 = por %p106, %p107
    %p109 = scmp.ne.s32.totalorder %s100, %s101
    %p110 = scmp.eq.s32.totalorder %s22, 0
    %p111 = por %p109, %p110
    %p112 = scmp.ne.s32.totalorder %s100, %s101
    %p113 = scmp.eq.s32.totalorder %s23, 1
    %p114 = por %p112, %p113
    %p116 = scmp.ne.s32.totalorder %s101, %s115
    %p117 = scmp.eq.s32.totalorder %s23, 0
    %p118 = por %p116, %p117
    %s120 = sadd.s32 %s119, 1
    %p123 = scmp.eq.s32.totalorder %s17, 1
    %p124 = scmp.ne.s32.totalorder %s119, %s121
    %p125 = scmp.eq.s32.totalorder %s17, 0
    %p126 = por %p124, %p125
    %p127 = scmp.ne.s32.totalorder %s119, %s121
    %p128 = scmp.eq.s32.totalorder %s22, 1
    %p129 = por %p127, %p128
    %p130 = scmp.ne.s32.totalorder %s121, %s122
    %p131 = scmp.eq.s32.totalorder %s22, 0
    %p132 = por %p130, %p131
    %p133 = scmp.ne.s32.totalorder %s121, %s122
    %p134 = scmp.eq.s32.totalorder %s23, 1
    %p135 = por %p133, %p134
    %p137 = scmp.ne.s32.totalorder %s122, %s136
    %p138 = scmp.eq.s32.totalorder %s23, 0
    %p139 = por %p137, %p138
    %s141 = sadd.s32 %s140, 1
    %p144 = scmp.eq.s32.totalorder %s17, 1
    %p145 = scmp.ne.s32.totalorder %s140, %s142
    %p146 = scmp.eq.s32.totalorder %s17, 0
    %p147 = por %p145, %p146
    %p148 = scmp.ne.s32.totalorder %s140, %s142
    %p149 = scmp.eq.s32.totalorder %s22, 1
    %p150 = por %p148, %p149
    %p151 = scmp.ne.s32.totalorder %s142, %s143
    %p152 = scmp.eq.s32.totalorder %s22, 0
    %p153 = por %p151, %p152
    %p154 = scmp.ne.s32.totalorder %s142, %s143
    %p155 = scmp.eq.s32.totalorder %s23, 1
    %p156 = por %p154, %p155
    %p158 = scmp.ne.s32.totalorder %s143, %s157
    %p159 = scmp.eq.s32.totalorder %s23, 0
    %p160 = por %p158, %p159
    %s162 = sadd.s32 %s161, 1
    %p165 = scmp.eq.s32.totalorder %s17, 1
    %p166 = scmp.ne.s32.totalorder %s161, %s163
    %p167 = scmp.eq.s32.totalorder %s17, 0
    %p168 = por %p166, %p167
    %p169 = scmp.ne.s32.totalorder %s161, %s163
    %p170 = scmp.eq.s32.totalorder %s22, 1
    %p171 = por %p169, %p170
    %p172 = scmp.ne.s32.totalorder %s163, %s164
    %p173 = scmp.eq.s32.totalorder %s22, 0
    %p174 = por %p172, %p173
    %p175 = scmp.ne.s32.totalorder %s163, %s164
    %p176 = scmp.eq.s32.totalorder %s23, 1
    %p177 = por %p175, %p176
    %p179 = scmp.ne.s32.totalorder %s164, %s178
    %p180 = scmp.eq.s32.totalorder %s23, 0
    %p181 = por %p179, %p180
    %s183 = sadd.s32 %s182, 1
    %p186 = scmp.eq.s32.totalorder %s17, 1
    %p187 = scmp.ne.s32.totalorder %s182, %s184
    %p188 = scmp.eq.s32.totalorder %s17, 0
    %p189 = por %p187, %p188
    %p190 = scmp.ne.s32.totalorder %s182, %s184
    %p191 = scmp.eq.s32.totalorder %s22, 1
    %p192 = por %p190, %p191
    %p193 = scmp.ne.s32.totalorder %s184, %s185
    %p194 = scmp.eq.s32.totalorder %s22, 0
    %p195 = por %p193, %p194
    %p196 = scmp.ne.s32.totalorder %s184, %s185
    %p197 = scmp.eq.s32.totalorder %s23, 1
    %p198 = por %p196, %p197
    %p200 = scmp.ne.s32.totalorder %s185, %s199
    %p201 = scmp.eq.s32.totalorder %s23, 0
    %p202 = por %p200, %p201
    %s204 = sadd.s32 %s203, 1
    %p207 = scmp.eq.s32.totalorder %s17, 1
    %p208 = scmp.ne.s32.totalorder %s203, %s205
    %p209 = scmp.eq.s32.totalorder %s17, 0
    %p210 = por %p208, %p209
    %p211 = scmp.ne.s32.totalorder %s203, %s205
    %p212 = scmp.eq.s32.totalorder %s22, 1
    %p213 = por %p211, %p212
    %p214 = scmp.ne.s32.totalorder %s205, %s206
    %p215 = scmp.eq.s32.totalorder %s22, 0
    %p216 = por %p214, %p215
    %p217 = scmp.ne.s32.totalorder %s205, %s206
    %p218 = scmp.eq.s32.totalorder %s23, 1
    %p219 = por %p217, %p218
    %p221 = scmp.ne.s32.totalorder %s206, %s220
    %p222 = scmp.eq.s32.totalorder %s23, 0
    %p223 = por %p221, %p222
    %s224 = ssub.s32 %s17, %s24
    %p225 = scmp.eq.s32.totalorder %s224, 0
    %s227 = sadd.s32 %s226, 1
    %s228 = scalar_select %p225, %s226, %s227
    %p231 = pneg %p225
    %p232 = scmp.eq.s32.totalorder %s17, 1
    %p233 = por %p231, %p232
    %p234 = scmp.ne.s32.totalorder %s226, %s229
    %p235 = scmp.eq.s32.totalorder %s17, 0
    %p236 = por %p234, %p235
    %p237 = scmp.ne.s32.totalorder %s226, %s229
    %p238 = scmp.eq.s32.totalorder %s22, 1
    %p239 = por %p237, %p238
    %p240 = scmp.ne.s32.totalorder %s229, %s230
    %p241 = scmp.eq.s32.totalorder %s22, 0
    %p242 = por %p240, %p241
    %p243 = scmp.ne.s32.totalorder %s229, %s230
    %p244 = scmp.eq.s32.totalorder %s23, 1
    %p245 = por %p243, %p244
    %p247 = scmp.ne.s32.totalorder %s230, %s246
    %p248 = scmp.eq.s32.totalorder %s23, 0
    %p249 = por %p247, %p248
    %p250 = scmp.le.s32.totalorder 1, %s17
    %p251 = scmp.lt.s32.totalorder %s17, 3
    %p252 = pnand %p250, %p251
    %p253 = pneg %p252
    // Predicated region
    $region9: #{tpu_custom_call.1} parent=5 // pred_check
      _
    $region10: #{tpu_custom_call.1} parent=5 // pred_check_branch
      %255 = sbr.rel (%p252) target = $region12
    $region11: #{tpu_custom_call.1} parent=5 // pred_region
      %s256 = ssub.s32 %s17, 1
      // Predicated region
      $region13: #{tpu_custom_call.1} parent=11 // pred_check
        %p257 = pneg %p90
      $region14: #{tpu_custom_call.1} parent=11 // pred_check_branch
        %259 = sbr.rel (%p257) target = $region16
      $region15: #{tpu_custom_call.1} parent=11 // pred_region
        _
      $region16: #{tpu_custom_call.1} parent=11 // pred_fallthru
        _
      // Predicated region
      $region17: #{tpu_custom_call.1} parent=11 // pred_check
        %p260 = pneg %p111
      $region18: #{tpu_custom_call.1} parent=11 // pred_check_branch
        %262 = sbr.rel (%p260) target = $region20
      $region19: #{tpu_custom_call.1} parent=11 // pred_region
        _
      $region20: #{tpu_custom_call.1} parent=11 // pred_fallthru
        _
      // Predicated region
      $region21: #{tpu_custom_call.1} parent=11 // pred_check
        %p263 = pneg %p132
      $region22: #{tpu_custom_call.1} parent=11 // pred_check_branch
        %265 = sbr.rel (%p263) target = $region24
      $region23: #{tpu_custom_call.1} parent=11 // pred_region
        _
      $region24: #{tpu_custom_call.1} parent=11 // pred_fallthru
        _
      // Predicated region
      $region25: #{tpu_custom_call.1} parent=11 // pred_check
        %p266 = pneg %p153
      $region26: #{tpu_custom_call.1} parent=11 // pred_check_branch
        %268 = sbr.rel (%p266) target = $region28
      $region27: #{tpu_custom_call.1} parent=11 // pred_region
        _
      $region28: #{tpu_custom_call.1} parent=11 // pred_fallthru
        _
      // Predicated region
      $region29: #{tpu_custom_call.1} parent=11 // pred_check
        %p269 = pneg %p174
      $region30: #{tpu_custom_call.1} parent=11 // pred_check_branch
        %271 = sbr.rel (%p269) target = $region32
      $region31: #{tpu_custom_call.1} parent=11 // pred_region
        _
      $region32: #{tpu_custom_call.1} parent=11 // pred_fallthru
        _
      // Predicated region
      $region33: #{tpu_custom_call.1} parent=11 // pred_check
        %p272 = pneg %p195
      $region34: #{tpu_custom_call.1} parent=11 // pred_check_branch
        %274 = sbr.rel (%p272) target = $region36
      $region35: #{tpu_custom_call.1} parent=11 // pred_region
        _
      $region36: #{tpu_custom_call.1} parent=11 // pred_fallthru
        _
      // Predicated region
      $region37: #{tpu_custom_call.1} parent=11 // pred_check
        %p275 = pneg %p216
      $region38: #{tpu_custom_call.1} parent=11 // pred_check_branch
        %277 = sbr.rel (%p275) target = $region40
      $region39: #{tpu_custom_call.1} parent=11 // pred_region
        _
      $region40: #{tpu_custom_call.1} parent=11 // pred_fallthru
        _
    $region12: #{tpu_custom_call.1} parent=5 // pred_fallthru
      _
    %p278 = scmp.lt.s32.totalorder %s17, 2
    // Predicated region
    $region41: #{tpu_custom_call.1} parent=5 // pred_check
      %p279 = pneg %p278
    $region42: #{tpu_custom_call.1} parent=5 // pred_check_branch
      %281 = sbr.rel (%p279) target = $region44
    $region43: #{tpu_custom_call.1} parent=5 // pred_region
      // Predicated region
      $region45: #{tpu_custom_call.1} parent=43 // pred_check
        %p282 = pneg %p37
      $region46: #{tpu_custom_call.1} parent=43 // pred_check_branch
        %284 = sbr.rel (%p282) target = $region48
      $region47: #{tpu_custom_call.1} parent=43 // pred_region
        %s285 = smul.u32 16, %s17
        %p286 = scmp.lt.s32.totalorder %s285, 31
        %s287 = scalar_select %p286, %s285, 31
        %s288 = smul.addr %s287, 8
        %s289 = scalar_lea.vmem %s0, %s288
        %s290 = smul.u32 16, %s17
      $region48: #{tpu_custom_call.1} parent=43 // pred_fallthru
        _
      // Predicated region
      $region49: #{tpu_custom_call.1} parent=43 // pred_check
        %p291 = pneg %p63
      $region50: #{tpu_custom_call.1} parent=43 // pred_check_branch
        %293 = sbr.rel (%p291) target = $region52
      $region51: #{tpu_custom_call.1} parent=43 // pred_region
        %s294 = smul.u32 16, %s17
        %p295 = scmp.lt.s32.totalorder %s294, 31
        %s296 = scalar_select %p295, %s294, 31
        %s297 = smul.addr %s296, 8
        %s298 = scalar_lea.vmem %s1, %s297
        %s299 = smul.u32 16, %s17
      $region52: #{tpu_custom_call.1} parent=43 // pred_fallthru
        _
    $region44: #{tpu_custom_call.1} parent=5 // pred_fallthru
      _
    %p300 = scmp.le.s32.totalorder 1, %s17
    %p301 = scmp.lt.s32.totalorder %s17, 3
    %p302 = pnand %p300, %p301
    %p303 = pneg %p302
    // Predicated region
    $region53: #{tpu_custom_call.1} parent=5 // pred_check
      _
    $region54: #{tpu_custom_call.1} parent=5 // pred_check_branch
      %305 = sbr.rel (%p302) target = $region56
    $region55: #{tpu_custom_call.1} parent=5 // pred_region
      %s306 = ssub.s32 %s17, 1
      %s307 = smul.u32 16, %s22
      %p308 = scmp.lt.s32.totalorder %s307, 31
      %s309 = scalar_select %p308, %s307, 31
      %s310 = smul.addr %s309, 8
      %s311 = scalar_lea.vmem %s0, %s310
      %p312 = pneg %p43
      %p313 = pneg %p40
      %s314 = smul.u32 16, %s22
      %p315 = scmp.lt.s32.totalorder %s314, 31
      %s316 = scalar_select %p315, %s314, 31
      %s317 = smul.addr %s316, 8
      %s318 = scalar_lea.vmem %s1, %s317
      %p319 = pneg %p69
      %p320 = pneg %p66
      %p321 = pneg %p90
      %p322 = pneg %p87
      %p323 = pneg %p111
      %p324 = pneg %p108
      %p325 = pneg %p132
      %p326 = pneg %p129
      %p327 = pneg %p153
      %p328 = pneg %p150
      %p329 = pneg %p174
      %p330 = pneg %p171
      %p331 = pneg %p195
      %p332 = pneg %p192
      %p333 = pneg %p216
      %p334 = pneg %p213
      %p335 = pneg %p242
      %p336 = pneg %p239
      %s337 = smul.u32 16, %s22
      %p338 = scmp.lt.s32.totalorder %s337, 31
      %s339 = scalar_select %p338, %s337, 31
      %s340 = smul.addr %s339, 8
      %s341 = scalar_lea.vmem %s9, %s340
      %s342 = smul.u32 16, %s22
      %p343 = scmp.lt.s32.totalorder %s342, 31
      %s344 = scalar_select %p343, %s342, 31
      %s345 = smul.addr %s344, 8
      %s346 = scalar_lea.vmem %s0, %s345
      %s347 = smul.u32 16, %s22
      %s348 = smul.u32 16, %s22
      %p349 = scmp.lt.s32.totalorder %s348, 31
      %s350 = scalar_select %p349, %s348, 31
      %s351 = smul.addr %s350, 8
      %s352 = scalar_lea.vmem %s1, %s351
      %s353 = smul.u32 16, %s22
      %s354 = smul.u32 16, %s22
      %p355 = scmp.lt.s32.totalorder %s354, 31
      %s356 = scalar_select %p355, %s354, 31
      %s357 = smul.addr %s356, 8
      %s358 = scalar_lea.vmem %s9, %s357
      %s359 = smul.u32 16, %s22
      %v361 = vld [vmem:[%s346] sm:$0xff]
      %v362 = vld [vmem:[%s346 + $0x8] sm:$0xff]
      %v363 = vld [vmem:[%s346 + $0x10] sm:$0xff]
      %v364 = vld [vmem:[%s346 + $0x18] sm:$0xff]
      %v365 = vld [vmem:[%s346 + $0x20] sm:$0xff]
      %v366 = vld [vmem:[%s346 + $0x28] sm:$0xff]
      %v367 = vld [vmem:[%s346 + $0x30] sm:$0xff]
      %v368 = vld [vmem:[%s346 + $0x38] sm:$0xff]
      %v369 = vld [vmem:[%s346 + $0x40] sm:$0xff]
      %v370 = vld [vmem:[%s346 + $0x48] sm:$0xff]
      %v371 = vld [vmem:[%s346 + $0x50] sm:$0xff]
      %v372 = vld [vmem:[%s346 + $0x58] sm:$0xff]
      %v373 = vld [vmem:[%s346 + $0x60] sm:$0xff]
      %v374 = vld [vmem:[%s346 + $0x68] sm:$0xff]
      %v375 = vld [vmem:[%s346 + $0x70] sm:$0xff]
      %v376 = vld [vmem:[%s346 + $0x78] sm:$0xff]
      %v377 = vpack.c.bf16 %v362, %v361
      %v378 = vpack.c.bf16 %v364, %v363
      %v379 = vpack.c.bf16 %v366, %v365
      %v380 = vpack.c.bf16 %v368, %v367
      %v381 = vpack.c.bf16 %v370, %v369
      %v382 = vpack.c.bf16 %v372, %v371
      %v383 = vpack.c.bf16 %v374, %v373
      %v384 = vpack.c.bf16 %v376, %v375
      %v385 = vld [vmem:[%s2] sm:$0xff]
      %v386 = vld [vmem:[%s2 + $0x8] sm:$0xff]
      %v387 = vpack.c.bf16 %v386, %v385
      %v388 = vld [vmem:[%s352] sm:$0xff]
      %v389 = vld [vmem:[%s352 + $0x8] sm:$0xff]
      %v390 = vld [vmem:[%s352 + $0x10] sm:$0xff]
      %v391 = vld [vmem:[%s352 + $0x18] sm:$0xff]
      %v392 = vld [vmem:[%s352 + $0x20] sm:$0xff]
      %v393 = vld [vmem:[%s352 + $0x28] sm:$0xff]
      %v394 = vld [vmem:[%s352 + $0x30] sm:$0xff]
      %v395 = vld [vmem:[%s352 + $0x38] sm:$0xff]
      %v396 = vld [vmem:[%s352 + $0x40] sm:$0xff]
      %v397 = vld [vmem:[%s352 + $0x48] sm:$0xff]
      %v398 = vld [vmem:[%s352 + $0x50] sm:$0xff]
      %v399 = vld [vmem:[%s352 + $0x58] sm:$0xff]
      %v400 = vld [vmem:[%s352 + $0x60] sm:$0xff]
      %v401 = vld [vmem:[%s352 + $0x68] sm:$0xff]
      %v402 = vld [vmem:[%s352 + $0x70] sm:$0xff]
      %v403 = vld [vmem:[%s352 + $0x78] sm:$0xff]
      %v404 = vpack.c.bf16 %v389, %v388
      %v405 = vpack.c.bf16 %v391, %v390
      %v406 = vpack.c.bf16 %v393, %v392
      %v407 = vpack.c.bf16 %v395, %v394
      %v408 = vpack.c.bf16 %v397, %v396
      %v409 = vpack.c.bf16 %v399, %v398
      %v410 = vpack.c.bf16 %v401, %v400
      %v411 = vpack.c.bf16 %v403, %v402
      %v412 = vld [vmem:[%s3] sm:$0xff]
      %v413 = vpack.c.bf16 %v412, %v412
      %vm414 = vcmask 64512
      %v416 = vsel %vm414, %v404, 0
      %v419 = vsel %vm414, %v405, 0
      %v422 = vsel %vm414, %v406, 0
      %v425 = vsel %vm414, %v407, 0
      %v428 = vsel %vm414, %v408, 0
      %v431 = vsel %vm414, %v409, 0
      %v434 = vsel %vm414, %v410, 0
      %v437 = vsel %vm414, %v411, 0
      %vm439 = vcmask 1043456
      %v441 = vsel %vm439, %v413, 0
      %443 = vmatpush.bf16.msra.mxu0 0
      %444 = vmatpush.bf16.msra.mxu0 0
      %445 = vmatpush.bf16.msra.mxu0 0
      %446 = vmatpush.bf16.msra.mxu0 0
      %447 = vmatpush.bf16.msra.mxu0 0
      %448 = vmatpush.bf16.msra.mxu0 0
      %449 = vmatpush.bf16.msra.mxu0 0
      %450 = vmatpush.bf16.msra.mxu0 %v441
      %451 = vmatmul.bf16.gmra.mxu0 %v416
      %v452 = vpop.f32.mrf.mxu0
      %v453 = vadd.f32 0.0, %v452
      %v454 = vpop.f32.mrf.mxu0
      %v455 = vadd.f32 0.0, %v454
      %456 = vmatmul.bf16.gmra.mxu0 %v419
      %v457 = vpop.f32.mrf.mxu0
      %v458 = vadd.f32 0.0, %v457
      %v459 = vpop.f32.mrf.mxu0
      %v460 = vadd.f32 0.0, %v459
      %461 = vmatmul.bf16.gmra.mxu0 %v422
      %v462 = vpop.f32.mrf.mxu0
      %v463 = vadd.f32 0.0, %v462
      %v464 = vpop.f32.mrf.mxu0
      %v465 = vadd.f32 0.0, %v464
      %466 = vmatmul.bf16.gmra.mxu0 %v425
      %v467 = vpop.f32.mrf.mxu0
      %v468 = vadd.f32 0.0, %v467
      %v469 = vpop.f32.mrf.mxu0
      %v470 = vadd.f32 0.0, %v469
      %471 = vmatmul.bf16.gmra.mxu0 %v428
      %v472 = vpop.f32.mrf.mxu0
      %v473 = vadd.f32 0.0, %v472
      %v474 = vpop.f32.mrf.mxu0
      %v475 = vadd.f32 0.0, %v474
      %476 = vmatmul.bf16.gmra.mxu0 %v431
      %v477 = vpop.f32.mrf.mxu0
      %v478 = vadd.f32 0.0, %v477
      %v479 = vpop.f32.mrf.mxu0
      %v480 = vadd.f32 0.0, %v479
      %481 = vmatmul.bf16.gmra.mxu0 %v434
      %v482 = vpop.f32.mrf.mxu0
      %v483 = vadd.f32 0.0, %v482
      %v484 = vpop.f32.mrf.mxu0
      %v485 = vadd.f32 0.0, %v484
      %486 = vmatmul.bf16.gmra.mxu0 %v437
      %v487 = vpop.f32.mrf.mxu0
      %v488 = vadd.f32 0.0, %v487
      %v489 = vpop.f32.mrf.mxu0
      %v490 = vadd.f32 0.0, %v489
      %491 = vdwg.mxu0
      %vm492 = vcmask 130048
      %v494 = vsel %vm492, %v377, 0
      %v497 = vsel %vm492, %v378, 0
      %v500 = vsel %vm492, %v379, 0
      %v503 = vsel %vm492, %v380, 0
      %v506 = vsel %vm492, %v381, 0
      %v509 = vsel %vm492, %v382, 0
      %v512 = vsel %vm492, %v383, 0
      %v515 = vsel %vm492, %v384, 0
      %517 = vmatpush.bf16.msra.mxu0 0
      %518 = vmatpush.bf16.msra.mxu0 0
      %519 = vmatpush.bf16.msra.mxu0 0
      %520 = vmatpush.bf16.msra.mxu0 0
      %521 = vmatpush.bf16.msra.mxu0 0
      %522 = vmatpush.bf16.msra.mxu0 0
      %523 = vmatpush.bf16.msra.mxu0 0
      %524 = vmatpush.bf16.msra.mxu0 %v387
      %525 = vmatmul.bf16.gmra.mxu0 %v494
      %v526 = vpop.f32.mrf.mxu0
      %v527 = vadd.f32 %v453, %v526
      %v528 = vpop.f32.mrf.mxu0
      %v529 = vadd.f32 %v455, %v528
      %530 = vmatmul.bf16.gmra.mxu0 %v497
      %v531 = vpop.f32.mrf.mxu0
      %v532 = vadd.f32 %v458, %v531
      %v533 = vpop.f32.mrf.mxu0
      %v534 = vadd.f32 %v460, %v533
      %535 = vmatmul.bf16.gmra.mxu0 %v500
      %v536 = vpop.f32.mrf.mxu0
      %v537 = vadd.f32 %v463, %v536
      %v538 = vpop.f32.mrf.mxu0
      %v539 = vadd.f32 %v465, %v538
      %540 = vmatmul.bf16.gmra.mxu0 %v503
      %v541 = vpop.f32.mrf.mxu0
      %v542 = vadd.f32 %v468, %v541
      %v543 = vpop.f32.mrf.mxu0
      %v544 = vadd.f32 %v470, %v543
      %545 = vmatmul.bf16.gmra.mxu0 %v506
      %v546 = vpop.f32.mrf.mxu0
      %v547 = vadd.f32 %v473, %v546
      %v548 = vpop.f32.mrf.mxu0
      %v549 = vadd.f32 %v475, %v548
      %550 = vmatmul.bf16.gmra.mxu0 %v509
      %v551 = vpop.f32.mrf.mxu0
      %v552 = vadd.f32 %v478, %v551
      %v553 = vpop.f32.mrf.mxu0
      %v554 = vadd.f32 %v480, %v553
      %555 = vmatmul.bf16.gmra.mxu0 %v512
      %v556 = vpop.f32.mrf.mxu0
      %v557 = vadd.f32 %v483, %v556
      %v558 = vpop.f32.mrf.mxu0
      %v559 = vadd.f32 %v485, %v558
      %560 = vmatmul.bf16.gmra.mxu0 %v515
      %v561 = vpop.f32.mrf.mxu0
      %v562 = vadd.f32 %v488, %v561
      %v563 = vpop.f32.mrf.mxu0
      %v564 = vadd.f32 %v490, %v563
      %565 = vdwg.mxu0
      %v566 = vld [vmem:[%s4] sm:$0x1]
      %v568 = vperm.slane %v566, 0
      %v570 = vadd.f32 %v527, %v568
      %v571 = vadd.f32 %v529, %v568
      %v572 = vadd.f32 %v532, %v568
      %v573 = vadd.f32 %v534, %v568
      %v574 = vadd.f32 %v537, %v568
      %v575 = vadd.f32 %v539, %v568
      %v576 = vadd.f32 %v542, %v568
      %v577 = vadd.f32 %v544, %v568
      %v578 = vadd.f32 %v547, %v568
      %v579 = vadd.f32 %v549, %v568
      %v580 = vadd.f32 %v552, %v568
      %v581 = vadd.f32 %v554, %v568
      %v582 = vadd.f32 %v557, %v568
      %v583 = vadd.f32 %v559, %v568
      %v584 = vadd.f32 %v562, %v568
      %v585 = vadd.f32 %v564, %v568
      %v586 = vmax.f32 %v570, 0.0
      %v587 = vmax.f32 %v571, 0.0
      %v588 = vmax.f32 %v572, 0.0
      %v589 = vmax.f32 %v573, 0.0
      %v590 = vmax.f32 %v574, 0.0
      %v591 = vmax.f32 %v575, 0.0
      %v592 = vmax.f32 %v576, 0.0
      %v593 = vmax.f32 %v577, 0.0
      %v594 = vmax.f32 %v578, 0.0
      %v595 = vmax.f32 %v579, 0.0
      %v596 = vmax.f32 %v580, 0.0
      %v597 = vmax.f32 %v581, 0.0
      %v598 = vmax.f32 %v582, 0.0
      %v599 = vmax.f32 %v583, 0.0
      %v600 = vmax.f32 %v584, 0.0
      %v601 = vmax.f32 %v585, 0.0
      %v602 = vpack.c.bf16 %v587, %v586
      %v603 = vpack.c.bf16 %v589, %v588
      %v604 = vpack.c.bf16 %v591, %v590
      %v605 = vpack.c.bf16 %v593, %v592
      %v606 = vpack.c.bf16 %v595, %v594
      %v607 = vpack.c.bf16 %v597, %v596
      %v608 = vpack.c.bf16 %v599, %v598
      %v609 = vpack.c.bf16 %v601, %v600
      %v610 = vld [vmem:[%s5] sm:$0xff]
      %v611 = vld [vmem:[%s5 + $0x8] sm:$0xff]
      %v612 = vld [vmem:[%s5 + $0x10] sm:$0xff]
      %v613 = vld [vmem:[%s5 + $0x18] sm:$0xff]
      %v614 = vpack.c.bf16 %v611, %v610
      %v615 = vpack.c.bf16 %v613, %v612
      %v616 = vld [vmem:[%s6] sm:$0x1]
      %v618 = vperm.slane %v616, 0
      %vm620 = vcmask 261120
      %v622 = vsel %vm620, %v602, 0
      %v625 = vsel %vm620, %v603, 0
      %v628 = vsel %vm620, %v604, 0
      %v631 = vsel %vm620, %v605, 0
      %v634 = vsel %vm620, %v606, 0
      %v637 = vsel %vm620, %v607, 0
      %v640 = vsel %vm620, %v608, 0
      %v643 = vsel %vm620, %v609, 0
      %645 = vmatpush.bf16.msra.mxu0 0
      %646 = vmatpush.bf16.msra.mxu0 0
      %647 = vmatpush.bf16.msra.mxu0 0
      %648 = vmatpush.bf16.msra.mxu0 0
      %649 = vmatpush.bf16.msra.mxu0 0
      %650 = vmatpush.bf16.msra.mxu0 0
      %651 = vmatpush.bf16.msra.mxu0 %v615
      %652 = vmatpush.bf16.msra.mxu0 %v614
      %653 = vmatmul.bf16.gmra.mxu0 %v622
      %v654 = vpop.f32.mrf.mxu0
      %v655 = vadd.f32 %v618, %v654
      %v656 = vpop.f32.mrf.mxu0
      %v657 = vadd.f32 %v618, %v656
      %658 = vmatmul.bf16.gmra.mxu0 %v625
      %v659 = vpop.f32.mrf.mxu0
      %v660 = vadd.f32 %v618, %v659
      %v661 = vpop.f32.mrf.mxu0
      %v662 = vadd.f32 %v618, %v661
      %663 = vmatmul.bf16.gmra.mxu0 %v628
      %v664 = vpop.f32.mrf.mxu0
      %v665 = vadd.f32 %v618, %v664
      %v666 = vpop.f32.mrf.mxu0
      %v667 = vadd.f32 %v618, %v666
      %668 = vmatmul.bf16.gmra.mxu0 %v631
      %v669 = vpop.f32.mrf.mxu0
      %v670 = vadd.f32 %v618, %v669
      %v671 = vpop.f32.mrf.mxu0
      %v672 = vadd.f32 %v618, %v671
      %673 = vmatmul.bf16.gmra.mxu0 %v634
      %v674 = vpop.f32.mrf.mxu0
      %v675 = vadd.f32 %v618, %v674
      %v676 = vpop.f32.mrf.mxu0
      %v677 = vadd.f32 %v618, %v676
      %678 = vmatmul.bf16.gmra.mxu0 %v637
      %v679 = vpop.f32.mrf.mxu0
      %v680 = vadd.f32 %v618, %v679
      %v681 = vpop.f32.mrf.mxu0
      %v682 = vadd.f32 %v618, %v681
      %683 = vmatmul.bf16.gmra.mxu0 %v640
      %v684 = vpop.f32.mrf.mxu0
      %v685 = vadd.f32 %v618, %v684
      %v686 = vpop.f32.mrf.mxu0
      %v687 = vadd.f32 %v618, %v686
      %688 = vmatmul.bf16.gmra.mxu0 %v643
      %v689 = vpop.f32.mrf.mxu0
      %v690 = vadd.f32 %v618, %v689
      %v691 = vpop.f32.mrf.mxu0
      %v692 = vadd.f32 %v618, %v691
      %693 = vdwg.mxu0
      %v694 = vmax.f32 %v655, 0.0
      %v695 = vmax.f32 %v657, 0.0
      %v696 = vmax.f32 %v660, 0.0
      %v697 = vmax.f32 %v662, 0.0
      %v698 = vmax.f32 %v665, 0.0
      %v699 = vmax.f32 %v667, 0.0
      %v700 = vmax.f32 %v670, 0.0
      %v701 = vmax.f32 %v672, 0.0
      %v702 = vmax.f32 %v675, 0.0
      %v703 = vmax.f32 %v677, 0.0
      %v704 = vmax.f32 %v680, 0.0
      %v705 = vmax.f32 %v682, 0.0
      %v706 = vmax.f32 %v685, 0.0
      %v707 = vmax.f32 %v687, 0.0
      %v708 = vmax.f32 %v690, 0.0
      %v709 = vmax.f32 %v692, 0.0
      %v710 = vld [vmem:[%s7] sm:$0x1]
      %v712 = vperm.slane %v710, 0
      %v714 = vmul.f32 %v694, %v712
      %v715 = vmul.f32 %v695, %v712
      %v716 = vmul.f32 %v696, %v712
      %v717 = vmul.f32 %v697, %v712
      %v718 = vmul.f32 %v698, %v712
      %v719 = vmul.f32 %v699, %v712
      %v720 = vmul.f32 %v700, %v712
      %v721 = vmul.f32 %v701, %v712
      %v722 = vmul.f32 %v702, %v712
      %v723 = vmul.f32 %v703, %v712
      %v724 = vmul.f32 %v704, %v712
      %v725 = vmul.f32 %v705, %v712
      %v726 = vmul.f32 %v706, %v712
      %v727 = vmul.f32 %v707, %v712
      %v728 = vmul.f32 %v708, %v712
      %v729 = vmul.f32 %v709, %v712
      %v730 = vsel %vm620, %v714, 0.0
      %731 = vadd.xlane.f32.xlu0 %v730
      %v732 = vpop.xlane.xlu0 %731
      %v733 = vsel %vm620, %v715, 0.0
      %734 = vadd.xlane.f32.xlu0 %v733
      %v735 = vpop.xlane.xlu0 %734
      %v736 = vsel %vm620, %v716, 0.0
      %737 = vadd.xlane.f32.xlu0 %v736
      %v738 = vpop.xlane.xlu0 %737
      %v739 = vsel %vm620, %v717, 0.0
      %740 = vadd.xlane.f32.xlu0 %v739
      %v741 = vpop.xlane.xlu0 %740
      %v742 = vsel %vm620, %v718, 0.0
      %743 = vadd.xlane.f32.xlu0 %v742
      %v744 = vpop.xlane.xlu0 %743
      %v745 = vsel %vm620, %v719, 0.0
      %746 = vadd.xlane.f32.xlu0 %v745
      %v747 = vpop.xlane.xlu0 %746
      %v748 = vsel %vm620, %v720, 0.0
      %749 = vadd.xlane.f32.xlu0 %v748
      %v750 = vpop.xlane.xlu0 %749
      %v751 = vsel %vm620, %v721, 0.0
      %752 = vadd.xlane.f32.xlu0 %v751
      %v753 = vpop.xlane.xlu0 %752
      %v754 = vsel %vm620, %v722, 0.0
      %755 = vadd.xlane.f32.xlu0 %v754
      %v756 = vpop.xlane.xlu0 %755
      %v757 = vsel %vm620, %v723, 0.0
      %758 = vadd.xlane.f32.xlu0 %v757
      %v759 = vpop.xlane.xlu0 %758
      %v760 = vsel %vm620, %v724, 0.0
      %761 = vadd.xlane.f32.xlu0 %v760
      %v762 = vpop.xlane.xlu0 %761
      %v763 = vsel %vm620, %v725, 0.0
      %764 = vadd.xlane.f32.xlu0 %v763
      %v765 = vpop.xlane.xlu0 %764
      %v766 = vsel %vm620, %v726, 0.0
      %767 = vadd.xlane.f32.xlu0 %v766
      %v768 = vpop.xlane.xlu0 %767
      %v769 = vsel %vm620, %v727, 0.0
      %770 = vadd.xlane.f32.xlu0 %v769
      %v771 = vpop.xlane.xlu0 %770
      %v772 = vsel %vm620, %v728, 0.0
      %773 = vadd.xlane.f32.xlu0 %v772
      %v774 = vpop.xlane.xlu0 %773
      %v775 = vsel %vm620, %v729, 0.0
      %776 = vadd.xlane.f32.xlu0 %v775
      %v777 = vpop.xlane.xlu0 %776
      %v778 = vld [vmem:[#allocation2] sm:$0x1]
      %v780 = vperm.slane %v778, 0
      %v782 = vadd.f32 %v732, %v780
      %v783 = vadd.f32 %v735, %v780
      %v784 = vadd.f32 %v738, %v780
      %v785 = vadd.f32 %v741, %v780
      %v786 = vadd.f32 %v744, %v780
      %v787 = vadd.f32 %v747, %v780
      %v788 = vadd.f32 %v750, %v780
      %v789 = vadd.f32 %v753, %v780
      %v790 = vadd.f32 %v756, %v780
      %v791 = vadd.f32 %v759, %v780
      %v792 = vadd.f32 %v762, %v780
      %v793 = vadd.f32 %v765, %v780
      %v794 = vadd.f32 %v768, %v780
      %v795 = vadd.f32 %v771, %v780
      %v796 = vadd.f32 %v774, %v780
      %v797 = vadd.f32 %v777, %v780
      %vm798 = vcmask 7168
      %799 = vst.msk [vmem:[%s358] sm:$0xff] %vm798, %v782
      %800 = vst.msk [vmem:[%s358 + $0x8] sm:$0xff] %vm798, %v783
      %801 = vst.msk [vmem:[%s358 + $0x10] sm:$0xff] %vm798, %v784
      %802 = vst.msk [vmem:[%s358 + $0x18] sm:$0xff] %vm798, %v785
      %803 = vst.msk [vmem:[%s358 + $0x20] sm:$0xff] %vm798, %v786
      %804 = vst.msk [vmem:[%s358 + $0x28] sm:$0xff] %vm798, %v787
      %805 = vst.msk [vmem:[%s358 + $0x30] sm:$0xff] %vm798, %v788
      %806 = vst.msk [vmem:[%s358 + $0x38] sm:$0xff] %vm798, %v789
      %807 = vst.msk [vmem:[%s358 + $0x40] sm:$0xff] %vm798, %v790
      %808 = vst.msk [vmem:[%s358 + $0x48] sm:$0xff] %vm798, %v791
      %809 = vst.msk [vmem:[%s358 + $0x50] sm:$0xff] %vm798, %v792
      %810 = vst.msk [vmem:[%s358 + $0x58] sm:$0xff] %vm798, %v793
      %811 = vst.msk [vmem:[%s358 + $0x60] sm:$0xff] %vm798, %v794
      %812 = vst.msk [vmem:[%s358 + $0x68] sm:$0xff] %vm798, %v795
      %813 = vst.msk [vmem:[%s358 + $0x70] sm:$0xff] %vm798, %v796
      %814 = vst.msk [vmem:[%s358 + $0x78] sm:$0xff] %vm798, %v797
      %s815 = smul.u32 16, %s22
      %p816 = scmp.lt.s32.totalorder %s815, 31
      %s817 = scalar_select %p816, %s815, 31
      %s818 = smul.addr %s817, 8
      %s819 = scalar_lea.vmem %s9, %s818
      // Predicated region
      $region57: #{tpu_custom_call.1} parent=55 // pred_check
        %p820 = pneg %p239
      $region58: #{tpu_custom_call.1} parent=55 // pred_check_branch
        %822 = sbr.rel (%p820) target = $region60
      $region59: #{tpu_custom_call.1} parent=55 // pred_region
        %s823 = smul.u32 16, %s22
      $region60: #{tpu_custom_call.1} parent=55 // pred_fallthru
        _
    $region56: #{tpu_custom_call.1} parent=5 // pred_fallthru
      _
    %p824 = scmp.le.s32.totalorder 2, %s17
    // Predicated region
    $region61: #{tpu_custom_call.1} parent=5 // pred_check
      %p825 = pneg %p824
    $region62: #{tpu_custom_call.1} parent=5 // pred_check_branch
      %827 = sbr.rel (%p825) target = $region64
    $region63: #{tpu_custom_call.1} parent=5 // pred_region
      %s828 = ssub.s32 %s17, 2
      // Predicated region
      $region65: #{tpu_custom_call.1} parent=63 // pred_check
        %p829 = pneg %p245
      $region66: #{tpu_custom_call.1} parent=63 // pred_check_branch
        %831 = sbr.rel (%p829) target = $region68
      $region67: #{tpu_custom_call.1} parent=63 // pred_region
        %s832 = smul.u32 16, %s23
        %p833 = scmp.lt.s32.totalorder %s832, 31
        %s834 = scalar_select %p833, %s832, 31
        %s835 = smul.addr %s834, 8
        %s836 = scalar_lea.vmem %s9, %s835
      $region68: #{tpu_custom_call.1} parent=63 // pred_fallthru
        _
    $region64: #{tpu_custom_call.1} parent=5 // pred_fallthru
      _
  $region6: #{tpu_custom_call.1} parent=0 // loop_footer
    %s21 = sadd.s32 1, %s17
  $region7: #{tpu_custom_call.1} parent=0 // loop_footer_branch
    %16 = sbr.rel target = $region3
  $region8: #{tpu_custom_call.1} parent=0 // loop_exit
    _

</llo_original>
